<compile_context>
chip_gen: v7x
topology: tpu7x:2x2x1
jax: 0.10.0
libtpu: 0.0.40
codegen_flags: <defaults>
</compile_context>

<pallas_src>
import functools

import jax
import jax.numpy as jnp
from jax.experimental import pallas as pl
from jax.experimental.pallas import tpu as pltpu

LANE = 128


def _round_up(v, m):
    return ((v + m - 1) // m) * m


# ---------------------------------------------------------------------------
# Pallas kernel: per-point MLP (Linear->ReLU->Linear->ReLU) + per-batch max pool
# ---------------------------------------------------------------------------
def _global_sa_kernel(feat_ref, w1_ref, b1_ref, w2_ref, b2_ref, out_ref, acc_ref,
                      *, n_valid, tile_n, mask_tail):
    t = pl.program_id(1)
    last = pl.num_programs(1) - 1

    @pl.when(t == 0)
    def _():
        acc_ref[...] = jnp.zeros_like(acc_ref)

    fb = feat_ref[...]                                        # (tn, 8) bf16 (x ++ pos ++ 0pad)

    # layer 1:  concat([x, pos]) @ W1  (single K=8 MXU push), f32 accumulation
    h = jnp.dot(fb, w1_ref[...], preferred_element_type=jnp.float32) + b1_ref[...]
    h = jnp.maximum(h, 0.0)                                   # (tn, H1p) f32

    # layer 2
    h = jnp.dot(h.astype(w2_ref.dtype), w2_ref[...],
                preferred_element_type=jnp.float32) + b2_ref[...]
    h = jnp.maximum(h, 0.0)                                   # (tn, H2p) f32, all >= 0

    def _accum(hv):
        # pure-VPU partial max: keep the 8-sublane group dim, reduce only across vregs
        part = jnp.max(hv.reshape(tile_n // 8, 8, hv.shape[-1]), axis=0)   # (8, H2p)
        acc_ref[...] = jnp.maximum(acc_ref[...], part)

    if mask_tail:
        # only the last point tile can contain padded rows -> full tiles skip the mask
        @pl.when(t == last)
        def _():
            row = t * tile_n + jax.lax.broadcasted_iota(jnp.int32, (tile_n, 1), 0)
            _accum(jnp.where(row < n_valid, h, 0.0))

        @pl.when(t != last)
        def _():
            _accum(h)
    else:
        _accum(h)

    # final 8-way cross-sublane (XLU) reduce + output store: once per batch
    @pl.when(t == last)
    def _():
        out_ref[0] = jnp.max(acc_ref[...], axis=0, keepdims=True)


# ---------------------------------------------------------------------------
# Parameter preparation (hoisted out of the forward path; call once at load time)
# ---------------------------------------------------------------------------
def prepare_global_sa_params(w1, b1, w2, b2):
    """w1: (Cin+3, H1), b1: (1, H1) or (H1,), w2: (H1, H2), b2: (1, H2) or (H2,)."""
    C1, H1 = w1.shape
    H2 = w2.shape[1]
    H1p = _round_up(H1, LANE)
    H2p = _round_up(H2, LANE)
    Cf = _round_up(C1, 8)                                     # feature channels padded to 8
    w1p = jnp.zeros((Cf, H1p), jnp.bfloat16).at[:C1, :H1].set(w1.astype(jnp.bfloat16))
    b1p = jnp.zeros((1, H1p), jnp.float32).at[:, :H1].set(jnp.reshape(b1, (1, H1)))
    w2p = jnp.zeros((H1p, H2p), jnp.bfloat16).at[:H1, :H2].set(w2.astype(jnp.bfloat16))
    b2p = jnp.zeros((1, H2p), jnp.float32).at[:, :H2].set(jnp.reshape(b2, (1, H2)))
    return dict(w1=w1p, b1=b1p, w2=w2p, b2=b2p, C1=C1, H2=H2)


# ---------------------------------------------------------------------------
# Forward wrapper
# ---------------------------------------------------------------------------
def global_sa_pallas(x, pos, B, padded_params, *, tn=256):
    """x: (N, Cin) f32, pos: (N, 3) f32, contiguous equal-size batches. Returns (B, H2) f32."""
    N, Cin = x.shape
    assert N % B == 0, "kernel assumes contiguous equal-sized batches"
    assert tn % 8 == 0
    n_per = N // B

    w1p, b1p, w2p, b2p = (padded_params["w1"], padded_params["b1"],
                          padded_params["w2"], padded_params["b2"])
    C1, H2 = padded_params["C1"], padded_params["H2"]
    Cf, H1p = w1p.shape
    H2p = w2p.shape[1]
    assert C1 == Cin + 3

    T = pl.cdiv(n_per, tn)                  # tiles along the point axis (tail zero-padded)
    n_pad = T * tn
    mask_tail = (n_pad != n_per)

    # Single combined bf16 feature stream: concat([x, pos]) with channel + point padding.
    feat = jnp.zeros((B, n_pad, Cf), jnp.bfloat16)
    feat = feat.at[:, :n_per, :Cin].set(x.reshape(B, n_per, Cin).astype(jnp.bfloat16))
    feat = feat.at[:, :n_per, Cin:Cin + 3].set(pos.reshape(B, n_per, 3).astype(jnp.bfloat16))

    kernel = functools.partial(_global_sa_kernel, n_valid=n_per, tile_n=tn,
                               mask_tail=mask_tail)

    flops = 2 * B * n_pad * (Cf * H1p + H1p * H2p)
    bytes_accessed = (B * n_pad * Cf * 2                       # feat (bf16)
                      + (Cf * H1p + H1p * H2p) * 2             # weights (bf16)
                      + (H1p + H2p) * 4                        # biases (f32)
                      + B * H2p * 4)                           # output (f32)

    out = pl.pallas_call(
        kernel,
        out_shape=jax.ShapeDtypeStruct((B, 1, H2p), jnp.float32),
        grid=(B, T),
        in_specs=[
            pl.BlockSpec((pl.Squeezed(), tn, Cf), lambda b, t: (b, t, 0)),
            pl.BlockSpec((Cf, H1p), lambda b, t: (0, 0)),
            pl.BlockSpec((1, H1p), lambda b, t: (0, 0)),
            pl.BlockSpec((H1p, H2p), lambda b, t: (0, 0)),
            pl.BlockSpec((1, H2p), lambda b, t: (0, 0)),
        ],
        out_specs=pl.BlockSpec((1, 1, H2p), lambda b, t: (b, 0, 0)),
        scratch_shapes=[pltpu.VMEM((8, H2p), jnp.float32)],
        compiler_params=pltpu.CompilerParams(
            # NOTE(v7x): B >= 2 keeps both TensorCores busy via the "parallel" B axis.
            dimension_semantics=("parallel", "arbitrary"),
        ),
        cost_estimate=pl.CostEstimate(flops=flops, transcendentals=0,
                                      bytes_accessed=bytes_accessed),
    )(feat, w1p, b1p, w2p, b2p)

    return out[:, 0, :H2]


def global_sa_module_forward(x, pos, batch, *, B, padded_params, tn=256):
    """Mirrors GlobalSAModule.forward: returns (x_out (B,H2), pos_out (B,3) zeros, batch_out (B,))."""
    x_out = global_sa_pallas(x, pos, B, padded_params, tn=tn)
    pos_out = jnp.zeros((B, 3), dtype=pos.dtype)
    batch_out = jnp.arange(B, dtype=jnp.int32)
    return x_out, pos_out, batch_out


# ---------------------------------------------------------------------------
# Plain-JAX reference (same bf16 matmul-operand quantization as the kernel)
# ---------------------------------------------------------------------------
def _reference(x, pos, B, w1, b1, w2, b2):
    feat = jnp.concatenate([x, pos], axis=1)
    h = jnp.dot(feat.astype(jnp.bfloat16), w1.astype(jnp.bfloat16),
                preferred_element_type=jnp.float32) + b1.reshape(1, -1)
    h = jnp.maximum(h, 0.0)
    h = jnp.dot(h.astype(jnp.bfloat16), w2.astype(jnp.bfloat16),
                preferred_element_type=jnp.float32) + b2.reshape(1, -1)
    h = jnp.maximum(h, 0.0)
    return jnp.max(h.reshape(B, -1, h.shape[-1]), axis=1)


if __name__ == "__main__":
    # Small deterministic problem: 2 graphs x 100 points, 4 input channels, MLP [7, 32, 64].
    B, n_per, Cin = 2, 100, 4
    N = B * n_per
    H1, H2 = 32, 64
    C1 = Cin + 3

    key = jax.random.PRNGKey(0)
    k1, k2, k3, k4, k5, k6 = jax.random.split(key, 6)
    pos = jax.random.uniform(k1, (N, 3), dtype=jnp.float32)
    x = jax.random.normal(k2, (N, Cin), dtype=jnp.float32)
    batch = jnp.repeat(jnp.arange(B, dtype=jnp.int32), n_per)

    w1 = jax.random.normal(k3, (C1, H1), dtype=jnp.float32) * 0.1
    b1 = jax.random.normal(k4, (1, H1), dtype=jnp.float32) * 0.1
    w2 = jax.random.normal(k5, (H1, H2), dtype=jnp.float32) * 0.1
    b2 = jax.random.normal(k6, (1, H2), dtype=jnp.float32) * 0.1

    # Parameter padding / bf16 cast done ONCE (outside the hot forward path).
    padded_params = prepare_global_sa_params(w1, b1, w2, b2)

    x_out, pos_out, batch_out = global_sa_module_forward(
        x, pos, batch, B=B, padded_params=padded_params, tn=256)
    x_out = jax.block_until_ready(x_out)

    # sanity vs plain-JAX reference
    ref = _reference(x, pos, B, w1, b1, w2, b2)
    assert x_out.shape == (B, H2)
    assert pos_out.shape == (B, 3) and batch_out.shape == (B,)
    assert bool(jnp.all(pos_out == 0.0))
    assert bool(jnp.all(batch_out == jnp.arange(B)))
    err = float(jnp.max(jnp.abs(x_out - ref)))
    assert err < 2e-2, f"max abs err {err}"

    print("KERNEL_OK")
</pallas_src>

<mosaic_0001>
module attributes {stable_mosaic.version = 11 : i64} {
  func.func @_global_sa_kernel(%arg0: i32, %arg1: i32, %arg2: memref<1x256x8xbf16, #tpu.memory_space<vmem>>, %arg3: memref<8x128xbf16, #tpu.memory_space<vmem>>, %arg4: memref<1x128xf32, #tpu.memory_space<vmem>>, %arg5: memref<128x128xbf16, #tpu.memory_space<vmem>>, %arg6: memref<1x128xf32, #tpu.memory_space<vmem>>, %arg7: memref<1x1x128xf32, #tpu.memory_space<vmem>>, %arg8: memref<8x128xf32, #tpu.memory_space<vmem>>) attributes {dimension_semantics = [#tpu.dimension_semantics<parallel>, #tpu.dimension_semantics<arbitrary>], iteration_bounds = array<i64: 2, 1>, scalar_prefetch = 0 : i64, scratch_operands = 1 : i64, tpu.core_type = #tpu.core_type<tc>, window_params = [{transform_indices = @transform_0, window_bounds = array<i64: 1, 256, 8>}, {pipeline_mode = #tpu.pipeline_mode<synchronous>, transform_indices = @transform_1, window_bounds = array<i64: 8, 128>}, {pipeline_mode = #tpu.pipeline_mode<synchronous>, transform_indices = @transform_2, window_bounds = array<i64: 1, 128>}, {pipeline_mode = #tpu.pipeline_mode<synchronous>, transform_indices = @transform_3, window_bounds = array<i64: 128, 128>}, {pipeline_mode = #tpu.pipeline_mode<synchronous>, transform_indices = @transform_4, window_bounds = array<i64: 1, 128>}, {transform_indices = @transform_5, window_bounds = array<i64: 1, 1, 128>}]} {
    %c0_i32 = arith.constant 0 : i32
    %0 = arith.cmpi eq, %arg1, %c0_i32 : i32
    %1 = arith.extui %0 : i1 to i32
    %c0_i32_0 = arith.constant 0 : i32
    %2 = arith.cmpi ne, %1, %c0_i32_0 : i32
    scf.if %2 {
      %cst_20 = arith.constant 0.000000e+00 : f32
      %29 = vector.broadcast %cst_20 : f32 to vector<8x128xf32>
      %c0_21 = arith.constant 0 : index
      %c0_22 = arith.constant 0 : index
      %30 = vector.load %arg8[%c0_21, %c0_22] : memref<8x128xf32, #tpu.memory_space<vmem>>, vector<8x128xf32>
      tpu.vector_store %arg8[%c0_21, %c0_22], %29 {strides = array<i32>} : memref<8x128xf32, #tpu.memory_space<vmem>>, vector<8x128xf32>,
    } else {
    }
    %c0 = arith.constant 0 : index
    %c0_1 = arith.constant 0 : index
    %c0_2 = arith.constant 0 : index
    %3 = vector.load %arg2[%c0, %c0_1, %c0_2] : memref<1x256x8xbf16, #tpu.memory_space<vmem>>, vector<1x256x8xbf16>
    %4 = vector.shape_cast %3 : vector<1x256x8xbf16> to vector<256x8xbf16>
    %c0_3 = arith.constant 0 : index
    %c0_4 = arith.constant 0 : index
    %5 = vector.load %arg3[%c0_3, %c0_4] : memref<8x128xbf16, #tpu.memory_space<vmem>>, vector<8x128xbf16>
    %cst = arith.constant dense<0.000000e+00> : vector<256x128xf32>
    %6 = tpu.matmul %4, %5, %cst {dimension_numbers = #tpu.dot_dimension_numbers<[1], [0], [0], [1], [0, 0, 1, 1], [], []>} : vector<256x8xbf16>, vector<8x128xbf16>, vector<256x128xf32> -> vector<256x128xf32>
    %c0_5 = arith.constant 0 : index
    %c0_6 = arith.constant 0 : index
    %7 = vector.load %arg4[%c0_5, %c0_6] : memref<1x128xf32, #tpu.memory_space<vmem>>, vector<1x128xf32>
    %8 = vector.broadcast %7 : vector<1x128xf32> to vector<256x128xf32>
    %9 = arith.addf %6, %8 : vector<256x128xf32>
    %cst_7 = arith.constant 0.000000e+00 : f32
    %10 = vector.broadcast %cst_7 : f32 to vector<256x128xf32>
    %11 = arith.maximumf %9, %10 : vector<256x128xf32>
    %12 = arith.truncf %11 : vector<256x128xf32> to vector<256x128xbf16>
    %c0_8 = arith.constant 0 : index
    %c0_9 = arith.constant 0 : index
    %13 = vector.load %arg5[%c0_8, %c0_9] : memref<128x128xbf16, #tpu.memory_space<vmem>>, vector<128x128xbf16>
    %cst_10 = arith.constant dense<0.000000e+00> : vector<256x128xf32>
    %14 = tpu.matmul %12, %13, %cst_10 {dimension_numbers = #tpu.dot_dimension_numbers<[1], [0], [0], [1], [0, 0, 1, 1], [], []>} : vector<256x128xbf16>, vector<128x128xbf16>, vector<256x128xf32> -> vector<256x128xf32>
    %c0_11 = arith.constant 0 : index
    %c0_12 = arith.constant 0 : index
    %15 = vector.load %arg6[%c0_11, %c0_12] : memref<1x128xf32, #tpu.memory_space<vmem>>, vector<1x128xf32>
    %16 = vector.broadcast %15 : vector<1x128xf32> to vector<256x128xf32>
    %17 = arith.addf %14, %16 : vector<256x128xf32>
    %cst_13 = arith.constant 0.000000e+00 : f32
    %18 = vector.broadcast %cst_13 : f32 to vector<256x128xf32>
    %19 = arith.maximumf %17, %18 : vector<256x128xf32>
    %c0_i32_14 = arith.constant 0 : i32
    %20 = arith.cmpi eq, %arg1, %c0_i32_14 : i32
    %21 = arith.extui %20 : i1 to i32
    %c0_i32_15 = arith.constant 0 : i32
    %22 = arith.cmpi ne, %21, %c0_i32_15 : i32
    scf.if %22 {
      %c256_i32 = arith.constant 256 : i32
      %29 = arith.muli %arg1, %c256_i32 : i32
      %30 = tpu.iota {dimensions = array<i32: 0>} : vector<256x1xi32>
      %31 = vector.broadcast %29 : i32 to vector<256x1xi32>
      %32 = arith.addi %31, %30 : vector<256x1xi32>
      %c100_i32 = arith.constant 100 : i32
      %33 = vector.broadcast %c100_i32 : i32 to vector<256x1xi32>
      %34 = arith.cmpi slt, %32, %33 : vector<256x1xi32>
      %cst_20 = arith.constant 0.000000e+00 : f32
      %35 = vector.shape_cast %34 : vector<256x1xi1> to vector<256x1xi1>
      %36 = vector.broadcast %35 : vector<256x1xi1> to vector<256x128xi1>
      %37 = vector.broadcast %cst_20 : f32 to vector<256x128xf32>
      %38 = arith.select %36, %19, %37 : vector<256x128xi1>, vector<256x128xf32>
      %39 = vector.shape_cast %38 : vector<256x128xf32> to vector<32x8x128xf32>
      %cst_21 = arith.constant dense<0xFF800000> : vector<8x128xf32>
      %40 = vector.multi_reduction <maximumf>, %39, %cst_21 [0] : vector<32x8x128xf32> to vector<8x128xf32>
      %c0_22 = arith.constant 0 : index
      %c0_23 = arith.constant 0 : index
      %41 = vector.load %arg8[%c0_22, %c0_23] : memref<8x128xf32, #tpu.memory_space<vmem>>, vector<8x128xf32>
      %42 = arith.maximumf %41, %40 : vector<8x128xf32>
      %c0_24 = arith.constant 0 : index
      %c0_25 = arith.constant 0 : index
      %43 = vector.load %arg8[%c0_24, %c0_25] : memref<8x128xf32, #tpu.memory_space<vmem>>, vector<8x128xf32>
      tpu.vector_store %arg8[%c0_24, %c0_25], %42 {strides = array<i32>} : memref<8x128xf32, #tpu.memory_space<vmem>>, vector<8x128xf32>,
    } else {
    }
    %c0_i32_16 = arith.constant 0 : i32
    %23 = arith.cmpi ne, %arg1, %c0_i32_16 : i32
    %24 = arith.extui %23 : i1 to i32
    %c0_i32_17 = arith.constant 0 : i32
    %25 = arith.cmpi ne, %24, %c0_i32_17 : i32
    scf.if %25 {
      %29 = vector.shape_cast %19 : vector<256x128xf32> to vector<32x8x128xf32>
      %cst_20 = arith.constant dense<0xFF800000> : vector<8x128xf32>
      %30 = vector.multi_reduction <maximumf>, %29, %cst_20 [0] : vector<32x8x128xf32> to vector<8x128xf32>
      %c0_21 = arith.constant 0 : index
      %c0_22 = arith.constant 0 : index
      %31 = vector.load %arg8[%c0_21, %c0_22] : memref<8x128xf32, #tpu.memory_space<vmem>>, vector<8x128xf32>
      %32 = arith.maximumf %31, %30 : vector<8x128xf32>
      %c0_23 = arith.constant 0 : index
      %c0_24 = arith.constant 0 : index
      %33 = vector.load %arg8[%c0_23, %c0_24] : memref<8x128xf32, #tpu.memory_space<vmem>>, vector<8x128xf32>
      tpu.vector_store %arg8[%c0_23, %c0_24], %32 {strides = array<i32>} : memref<8x128xf32, #tpu.memory_space<vmem>>, vector<8x128xf32>,
    } else {
    }
    %c0_i32_18 = arith.constant 0 : i32
    %26 = arith.cmpi eq, %arg1, %c0_i32_18 : i32
    %27 = arith.extui %26 : i1 to i32
    %c0_i32_19 = arith.constant 0 : i32
    %28 = arith.cmpi ne, %27, %c0_i32_19 : i32
    scf.if %28 {
      %c0_20 = arith.constant 0 : index
      %c0_21 = arith.constant 0 : index
      %29 = vector.load %arg8[%c0_20, %c0_21] : memref<8x128xf32, #tpu.memory_space<vmem>>, vector<8x128xf32>
      %cst_22 = arith.constant dense<0xFF800000> : vector<128xf32>
      %30 = vector.multi_reduction <maximumf>, %29, %cst_22 [0] : vector<8x128xf32> to vector<128xf32>
      %31 = vector.shape_cast %30 : vector<128xf32> to vector<1x128xf32>
      %c0_23 = arith.constant 0 : index
      %c0_24 = arith.constant 0 : index
      %c0_25 = arith.constant 0 : index
      %32 = vector.load %arg7[%c0_23, %c0_24, %c0_25] : memref<1x1x128xf32, #tpu.memory_space<vmem>>, vector<1x1x128xf32>
      %33 = vector.shape_cast %32 : vector<1x1x128xf32> to vector<1x128xf32>
      %34 = vector.shape_cast %31 : vector<1x128xf32> to vector<1x1x128xf32>
      tpu.vector_store %arg7[%c0_23, %c0_24, %c0_25], %34 {strides = array<i32>} : memref<1x1x128xf32, #tpu.memory_space<vmem>>, vector<1x1x128xf32>,
    } else {
    }
    return
  }
  func.func @transform_0(%arg0: i32, %arg1: i32) -> (i32, i32, i32) {
    %c0_i32 = arith.constant 0 : i32
    %c0_i32_0 = arith.constant 0 : i32
    return %arg0, %arg1, %c0_i32 : i32, i32, i32
  }
  func.func @transform_1(%arg0: i32, %arg1: i32) -> (i32, i32) {
    %c0_i32 = arith.constant 0 : i32
    %c0_i32_0 = arith.constant 0 : i32
    %c0_i32_1 = arith.constant 0 : i32
    return %c0_i32, %c0_i32_0 : i32, i32
  }
  func.func @transform_2(%arg0: i32, %arg1: i32) -> (i32, i32) {
    %c0_i32 = arith.constant 0 : i32
    %c0_i32_0 = arith.constant 0 : i32
    %c0_i32_1 = arith.constant 0 : i32
    return %c0_i32, %c0_i32_0 : i32, i32
  }
  func.func @transform_3(%arg0: i32, %arg1: i32) -> (i32, i32) {
    %c0_i32 = arith.constant 0 : i32
    %c0_i32_0 = arith.constant 0 : i32
    %c0_i32_1 = arith.constant 0 : i32
    return %c0_i32, %c0_i32_0 : i32, i32
  }
  func.func @transform_4(%arg0: i32, %arg1: i32) -> (i32, i32) {
    %c0_i32 = arith.constant 0 : i32
    %c0_i32_0 = arith.constant 0 : i32
    %c0_i32_1 = arith.constant 0 : i32
    return %c0_i32, %c0_i32_0 : i32, i32
  }
  func.func @transform_5(%arg0: i32, %arg1: i32) -> (i32, i32, i32) {
    %c0_i32 = arith.constant 0 : i32
    %c0_i32_0 = arith.constant 0 : i32
    %c0_i32_1 = arith.constant 0 : i32
    return %arg0, %c0_i32, %c0_i32_0 : i32, i32, i32
  }
}

</mosaic_0001>

<llo_original>
// kernel: tpu_custom_call.1
$region0: #{tpu_custom_call.1}
  #allocation0 [shape = 'u32[]', space=smem, size = 0x4, offset = 0x4, fixed_abs, tag = 'smem constant byte address 0x4 - core index']
  #allocation1 [shape = 'u32[144,128]{1,0:T(1,128)}', space=vmem, size = 0x12000, scoped, tag = 'internal scratch']
  #allocation2 [shape = 'f32[8,128]{1,0:T(8,128)}', space=vmem, size = 0x1000, scoped, tag = 'scratch operand']
  %s0 = inlined_call_operand.vmem [shape: bf16[2,256,8], index: 0, kind: input, shape index: {}]
  %s1 = inlined_call_operand.vmem [shape: bf16[8,128], index: 1, kind: input, shape index: {}]
  %s2 = inlined_call_operand.vmem [shape: f32[1,128], index: 2, kind: input, shape index: {}]
  %s3 = inlined_call_operand.vmem [shape: bf16[128,128], index: 3, kind: input, shape index: {}]
  %s4 = inlined_call_operand.vmem [shape: f32[1,128], index: 4, kind: input, shape index: {}]
  %s5 = inlined_call_operand.hbm [shape: f32[2,1,128], index: 5, kind: output, shape index: {}]
  %s6 = sld [smem:[#allocation0]]
  $region69: #{tpu_custom_call.1} parent=0
    _
  %s8 = ssub.s32 1, %s6
  %s9 = scalar_select 0, %s8, %s6
  $region1: #{tpu_custom_call.1} parent=0
    #allocation3 [shape = 'u8[1024]{0}', space=vmem, size = 0x400, scoped, tag = 'output window, operand 0']
    #allocation4 [shape = 's32[2]{0}', space=sflag, size = 0x8, scoped, tag = 'scoped memory for tpu_custom_call.1']
    %10 = vsyncpa [#allocation4], 0
    %s11 = scalar_lea.sflag [#allocation4], 1
    %12 = vsyncpa %s11, 0
    loop: start=0, step=1, limit=4
    $region2: #{tpu_custom_call.1} parent=1 // loop_pre_header
      _
    $region3: #{tpu_custom_call.1} parent=1 // loop_header
      %s14 = sphi 0, %s18
      %p15 = scmp.ge.s32.totalorder %s14, 4
      %s21 = sphi 0, %s33
      %s22 = sphi 0, %s29
      %s23 = sphi 0, %s21
      %s24 = sphi 0, %s22
      %s25 = sphi 0, %s23
      %s26 = sphi 0, %s24
      %s38 = sphi 0, %s40
      %s41 = sphi 0, %s38
      %s42 = sphi 0, %s41
      %s58 = sphi 0, %s42
      %s62 = sphi 0, %s62
      %s64 = sphi 0, %s62
      %s65 = sphi 0, %s64
      %s79 = sphi 0, %s65
      %s83 = sphi 0, %s83
      %s85 = sphi 0, %s83
      %s86 = sphi 0, %s85
      %s100 = sphi 0, %s86
      %s104 = sphi 0, %s104
      %s106 = sphi 0, %s104
      %s107 = sphi 0, %s106
      %s121 = sphi 0, %s107
      %s125 = sphi 0, %s125
      %s127 = sphi 0, %s125
      %s128 = sphi 0, %s127
      %s142 = sphi 0, %s128
      %s148 = sphi 0, %s150
      %s151 = sphi 0, %s148
      %s152 = sphi 0, %s151
      %s168 = sphi 0, %s152
    $region4: #{tpu_custom_call.1} parent=1 // loop_header_branch
      %17 = sbr.rel (%p15) target = $region8
    $region5: #{tpu_custom_call.1} parent=1 // loop_body
      %s19 = ssub.s32 %s14, 1
      %s20 = ssub.s32 %s14, 2
      %s27 = sadd.s32 1, %s22
      %p28 = scmp.ge.s32.totalorder %s27, 1
      %s29 = scalar_select %p28, 0, %s27
      %s30 = sadd.s32 1, %s21
      %s31 = scalar_select %p28, %s30, %s21
      %p32 = scmp.ge.s32.totalorder %s31, 2
      %s33 = scalar_select %p32, 0, %s31
      %s34 = ssub.s32 %s21, %s33
      %s35 = ssub.s32 %s22, %s29
      %s36 = sor.u32 %s34, %s35
      %p37 = scmp.eq.s32.totalorder %s36, 0
      %s39 = sadd.s32 %s38, 1
      %s40 = scalar_select %p37, %s38, %s39
      %p43 = pneg %p37
      %p44 = scmp.eq.s32.totalorder %s14, 1
      %p45 = por %p43, %p44
      %p46 = scmp.ne.s32.totalorder %s38, %s41
      %p47 = scmp.eq.s32.totalorder %s14, 0
      %p48 = por %p46, %p47
      %p49 = scmp.ne.s32.totalorder %s38, %s41
      %p50 = scmp.eq.s32.totalorder %s19, 1
      %p51 = por %p49, %p50
      %p52 = scmp.ne.s32.totalorder %s41, %s42
      %p53 = scmp.eq.s32.totalorder %s19, 0
      %p54 = por %p52, %p53
      %p55 = scmp.ne.s32.totalorder %s41, %s42
      %p56 = scmp.eq.s32.totalorder %s20, 1
      %p57 = por %p55, %p56
      %p59 = scmp.ne.s32.totalorder %s42, %s58
      %p60 = scmp.eq.s32.totalorder %s20, 0
      %p61 = por %p59, %p60
      %s63 = sadd.s32 %s62, 1
      %p66 = scmp.eq.s32.totalorder %s14, 1
      %p67 = scmp.ne.s32.totalorder %s62, %s64
      %p68 = scmp.eq.s32.totalorder %s14, 0
      %p69 = por %p67, %p68
      %p70 = scmp.ne.s32.totalorder %s62, %s64
      %p71 = scmp.eq.s32.totalorder %s19, 1
      %p72 = por %p70, %p71
      %p73 = scmp.ne.s32.totalorder %s64, %s65
      %p74 = scmp.eq.s32.totalorder %s19, 0
      %p75 = por %p73, %p74
      %p76 = scmp.ne.s32.totalorder %s64, %s65
      %p77 = scmp.eq.s32.totalorder %s20, 1
      %p78 = por %p76, %p77
      %p80 = scmp.ne.s32.totalorder %s65, %s79
      %p81 = scmp.eq.s32.totalorder %s20, 0
      %p82 = por %p80, %p81
      %s84 = sadd.s32 %s83, 1
      %p87 = scmp.eq.s32.totalorder %s14, 1
      %p88 = scmp.ne.s32.totalorder %s83, %s85
      %p89 = scmp.eq.s32.totalorder %s14, 0
      %p90 = por %p88, %p89
      %p91 = scmp.ne.s32.totalorder %s83, %s85
      %p92 = scmp.eq.s32.totalorder %s19, 1
      %p93 = por %p91, %p92
      %p94 = scmp.ne.s32.totalorder %s85, %s86
      %p95 = scmp.eq.s32.totalorder %s19, 0
      %p96 = por %p94, %p95
      %p97 = scmp.ne.s32.totalorder %s85, %s86
      %p98 = scmp.eq.s32.totalorder %s20, 1
      %p99 = por %p97, %p98
      %p101 = scmp.ne.s32.totalorder %s86, %s100
      %p102 = scmp.eq.s32.totalorder %s20, 0
      %p103 = por %p101, %p102
      %s105 = sadd.s32 %s104, 1
      %p108 = scmp.eq.s32.totalorder %s14, 1
      %p109 = scmp.ne.s32.totalorder %s104, %s106
      %p110 = scmp.eq.s32.totalorder %s14, 0
      %p111 = por %p109, %p110
      %p112 = scmp.ne.s32.totalorder %s104, %s106
      %p113 = scmp.eq.s32.totalorder %s19, 1
      %p114 = por %p112, %p113
      %p115 = scmp.ne.s32.totalorder %s106, %s107
      %p116 = scmp.eq.s32.totalorder %s19, 0
      %p117 = por %p115, %p116
      %p118 = scmp.ne.s32.totalorder %s106, %s107
      %p119 = scmp.eq.s32.totalorder %s20, 1
      %p120 = por %p118, %p119
      %p122 = scmp.ne.s32.totalorder %s107, %s121
      %p123 = scmp.eq.s32.totalorder %s20, 0
      %p124 = por %p122, %p123
      %s126 = sadd.s32 %s125, 1
      %p129 = scmp.eq.s32.totalorder %s14, 1
      %p130 = scmp.ne.s32.totalorder %s125, %s127
      %p131 = scmp.eq.s32.totalorder %s14, 0
      %p132 = por %p130, %p131
      %p133 = scmp.ne.s32.totalorder %s125, %s127
      %p134 = scmp.eq.s32.totalorder %s19, 1
      %p135 = por %p133, %p134
      %p136 = scmp.ne.s32.totalorder %s127, %s128
      %p137 = scmp.eq.s32.totalorder %s19, 0
      %p138 = por %p136, %p137
      %p139 = scmp.ne.s32.totalorder %s127, %s128
      %p140 = scmp.eq.s32.totalorder %s20, 1
      %p141 = por %p139, %p140
      %p143 = scmp.ne.s32.totalorder %s128, %s142
      %p144 = scmp.eq.s32.totalorder %s20, 0
      %p145 = por %p143, %p144
      %s146 = ssub.s32 %s21, %s33
      %p147 = scmp.eq.s32.totalorder %s146, 0
      %s149 = sadd.s32 %s148, 1
      %s150 = scalar_select %p147, %s148, %s149
      %p153 = pneg %p147
      %p154 = scmp.eq.s32.totalorder %s14, 1
      %p155 = por %p153, %p154
      %p156 = scmp.ne.s32.totalorder %s148, %s151
      %p157 = scmp.eq.s32.totalorder %s14, 0
      %p158 = por %p156, %p157
      %p159 = scmp.ne.s32.totalorder %s148, %s151
      %p160 = scmp.eq.s32.totalorder %s19, 1
      %p161 = por %p159, %p160
      %p162 = scmp.ne.s32.totalorder %s151, %s152
      %p163 = scmp.eq.s32.totalorder %s19, 0
      %p164 = por %p162, %p163
      %p165 = scmp.ne.s32.totalorder %s151, %s152
      %p166 = scmp.eq.s32.totalorder %s20, 1
      %p167 = por %p165, %p166
      %p169 = scmp.ne.s32.totalorder %s152, %s168
      %p170 = scmp.eq.s32.totalorder %s20, 0
      %p171 = por %p169, %p170
      %p172 = scmp.le.s32.totalorder 1, %s14
      %p173 = scmp.lt.s32.totalorder %s14, 3
      %p174 = pnand %p172, %p173
      %p175 = pneg %p174
      // Predicated region
      $region9: #{tpu_custom_call.1} parent=5 // pred_check
        _
      $region10: #{tpu_custom_call.1} parent=5 // pred_check_branch
        %177 = sbr.rel (%p174) target = $region12
      $region11: #{tpu_custom_call.1} parent=5 // pred_region
        %s178 = ssub.s32 %s14, 1
        // Predicated region
        $region13: #{tpu_custom_call.1} parent=11 // pred_check
          %p179 = pneg %p75
        $region14: #{tpu_custom_call.1} parent=11 // pred_check_branch
          %181 = sbr.rel (%p179) target = $region16
        $region15: #{tpu_custom_call.1} parent=11 // pred_region
          _
        $region16: #{tpu_custom_call.1} parent=11 // pred_fallthru
          _
        // Predicated region
        $region17: #{tpu_custom_call.1} parent=11 // pred_check
          %p182 = pneg %p96
        $region18: #{tpu_custom_call.1} parent=11 // pred_check_branch
          %184 = sbr.rel (%p182) target = $region20
        $region19: #{tpu_custom_call.1} parent=11 // pred_region
          _
        $region20: #{tpu_custom_call.1} parent=11 // pred_fallthru
          _
        // Predicated region
        $region21: #{tpu_custom_call.1} parent=11 // pred_check
          %p185 = pneg %p117
        $region22: #{tpu_custom_call.1} parent=11 // pred_check_branch
          %187 = sbr.rel (%p185) target = $region24
        $region23: #{tpu_custom_call.1} parent=11 // pred_region
          _
        $region24: #{tpu_custom_call.1} parent=11 // pred_fallthru
          _
        // Predicated region
        $region25: #{tpu_custom_call.1} parent=11 // pred_check
          %p188 = pneg %p138
        $region26: #{tpu_custom_call.1} parent=11 // pred_check_branch
          %190 = sbr.rel (%p188) target = $region28
        $region27: #{tpu_custom_call.1} parent=11 // pred_region
          _
        $region28: #{tpu_custom_call.1} parent=11 // pred_fallthru
          _
      $region12: #{tpu_custom_call.1} parent=5 // pred_fallthru
        _
      %p191 = scmp.lt.s32.totalorder %s14, 2
      // Predicated region
      $region29: #{tpu_custom_call.1} parent=5 // pred_check
        %p192 = pneg %p191
      $region30: #{tpu_custom_call.1} parent=5 // pred_check_branch
        %194 = sbr.rel (%p192) target = $region32
      $region31: #{tpu_custom_call.1} parent=5 // pred_region
        // Predicated region
        $region33: #{tpu_custom_call.1} parent=31 // pred_check
          %p195 = pneg %p48
        $region34: #{tpu_custom_call.1} parent=31 // pred_check_branch
          %197 = sbr.rel (%p195) target = $region36
        $region35: #{tpu_custom_call.1} parent=31 // pred_region
          %s198 = smul.u32 32, %s22
          %p199 = scmp.lt.s32.totalorder %s21, 1
          %s200 = scalar_select %p199, %s21, 1
          %p201 = scmp.lt.s32.totalorder %s198, 31
          %s202 = scalar_select %p201, %s198, 31
          %s203 = smul.addr %s200, 32
          %s204 = sadd.s32 %s202, %s203
          %s205 = smul.addr %s204, 4
          %s206 = scalar_lea.vmem %s0, %s205
          %s207 = smul.u32 32, %s22
        $region36: #{tpu_custom_call.1} parent=31 // pred_fallthru
          _
      $region32: #{tpu_custom_call.1} parent=5 // pred_fallthru
        _
      %p208 = scmp.le.s32.totalorder 1, %s14
      %p209 = scmp.lt.s32.totalorder %s14, 3
      %p210 = pnand %p208, %p209
      %p211 = pneg %p210
      // Predicated region
      $region37: #{tpu_custom_call.1} parent=5 // pred_check
        _
      $region38: #{tpu_custom_call.1} parent=5 // pred_check_branch
        %213 = sbr.rel (%p210) target = $region40
      $region39: #{tpu_custom_call.1} parent=5 // pred_region
        %s214 = ssub.s32 %s14, 1
        %s215 = smul.u32 32, %s24
        %p216 = scmp.lt.s32.totalorder %s23, 1
        %s217 = scalar_select %p216, %s23, 1
        %p218 = scmp.lt.s32.totalorder %s215, 31
        %s219 = scalar_select %p218, %s215, 31
        %s220 = smul.addr %s217, 32
        %s221 = sadd.s32 %s219, %s220
        %s222 = smul.addr %s221, 4
        %s223 = scalar_lea.vmem %s0, %s222
        %p224 = pneg %p54
        %p225 = pneg %p51
        %p226 = pneg %p75
        %p227 = pneg %p72
        %p228 = pneg %p96
        %p229 = pneg %p93
        %p230 = pneg %p117
        %p231 = pneg %p114
        %p232 = pneg %p138
        %p233 = pneg %p135
        %p234 = pneg %p164
        %p235 = pneg %p161
        %s236 = sand.u32 %s151, 1
        %s237 = scalar_lea.sflag [#allocation4], %s236
        %s238 = sand.u32 %s151, 1
        %s239 = scalar_lea.vmem [#allocation3], %s238
        %s240 = smul.u32 32, %s24
        %p241 = scmp.lt.s32.totalorder %s23, 1
        %s242 = scalar_select %p241, %s23, 1
        %p243 = scmp.lt.s32.totalorder %s240, 31
        %s244 = scalar_select %p243, %s240, 31
        %s245 = smul.addr %s242, 32
        %s246 = sadd.s32 %s244, %s245
        %s247 = smul.addr %s246, 4
        %s248 = scalar_lea.vmem %s0, %s247
        %s249 = smul.u32 32, %s24
        %p251 = scmp.eq.s32.totalorder %s24, 0
        // Predicated region
        $region41: #{tpu_custom_call.1} parent=39 // pred_check
          %p252 = pneg %p251
        $region42: #{tpu_custom_call.1} parent=39 // pred_check_branch
          %254 = sbr.rel (%p252) target = $region44
        $region43: #{tpu_custom_call.1} parent=39 // pred_region
          %255 = vst [vmem:[#allocation2] sm:$0xff] 0.0
        $region44: #{tpu_custom_call.1} parent=39 // pred_fallthru
          _
        %v256 = vld [vmem:[%s248] sm:$0xf]
        %v257 = vld [vmem:[%s248 + $0x4] sm:$0xf]
        %v258 = vld [vmem:[%s248 + $0x8] sm:$0xf]
        %v259 = vld [vmem:[%s248 + $0xc] sm:$0xf]
        %v260 = vld [vmem:[%s248 + $0x10] sm:$0xf]
        %v261 = vld [vmem:[%s248 + $0x14] sm:$0xf]
        %v262 = vld [vmem:[%s248 + $0x18] sm:$0xf]
        %v263 = vld [vmem:[%s248 + $0x1c] sm:$0xf]
        %v264 = vld [vmem:[%s248 + $0x20] sm:$0xf]
        %v265 = vld [vmem:[%s248 + $0x24] sm:$0xf]
        %v266 = vld [vmem:[%s248 + $0x28] sm:$0xf]
        %v267 = vld [vmem:[%s248 + $0x2c] sm:$0xf]
        %v268 = vld [vmem:[%s248 + $0x30] sm:$0xf]
        %v269 = vld [vmem:[%s248 + $0x34] sm:$0xf]
        %v270 = vld [vmem:[%s248 + $0x38] sm:$0xf]
        %v271 = vld [vmem:[%s248 + $0x3c] sm:$0xf]
        %v272 = vld [vmem:[%s248 + $0x40] sm:$0xf]
        %v273 = vld [vmem:[%s248 + $0x44] sm:$0xf]
        %v274 = vld [vmem:[%s248 + $0x48] sm:$0xf]
        %v275 = vld [vmem:[%s248 + $0x4c] sm:$0xf]
        %v276 = vld [vmem:[%s248 + $0x50] sm:$0xf]
        %v277 = vld [vmem:[%s248 + $0x54] sm:$0xf]
        %v278 = vld [vmem:[%s248 + $0x58] sm:$0xf]
        %v279 = vld [vmem:[%s248 + $0x5c] sm:$0xf]
        %v280 = vld [vmem:[%s248 + $0x60] sm:$0xf]
        %v281 = vld [vmem:[%s248 + $0x64] sm:$0xf]
        %v282 = vld [vmem:[%s248 + $0x68] sm:$0xf]
        %v283 = vld [vmem:[%s248 + $0x6c] sm:$0xf]
        %v284 = vld [vmem:[%s248 + $0x70] sm:$0xf]
        %v285 = vld [vmem:[%s248 + $0x74] sm:$0xf]
        %v286 = vld [vmem:[%s248 + $0x78] sm:$0xf]
        %v287 = vld [vmem:[%s248 + $0x7c] sm:$0xf]
        %v288 = vld [vmem:[%s1] sm:$0xf]
        %v289 = vld [vmem:[%s2] sm:$0x1]
        %v291 = vlaneseq
        %v292 = vshrl.u32 %v291, 7
        %v293 = vsub.s32 0, %v292
        %v294 = vrot.slane %v289, %v293
        %v328 = vunpack.c.l.b16 %v256
        %v329 = vunpack.c.l.b16 %v257
        %v330 = vunpack.c.l.b16 %v258
        %v331 = vunpack.c.l.b16 %v259
        %v332 = vunpack.c.l.b16 %v260
        %v333 = vunpack.c.l.b16 %v261
        %v334 = vunpack.c.l.b16 %v262
        %v335 = vunpack.c.l.b16 %v263
        %v336 = vunpack.c.l.b16 %v264
        %v337 = vunpack.c.l.b16 %v265
        %v338 = vunpack.c.l.b16 %v266
        %v339 = vunpack.c.l.b16 %v267
        %v340 = vunpack.c.l.b16 %v268
        %v341 = vunpack.c.l.b16 %v269
        %v342 = vunpack.c.l.b16 %v270
        %v343 = vunpack.c.l.b16 %v271
        %v344 = vunpack.c.l.b16 %v272
        %v345 = vunpack.c.l.b16 %v273
        %v346 = vunpack.c.l.b16 %v274
        %v347 = vunpack.c.l.b16 %v275
        %v348 = vunpack.c.l.b16 %v276
        %v349 = vunpack.c.l.b16 %v277
        %v350 = vunpack.c.l.b16 %v278
        %v351 = vunpack.c.l.b16 %v279
        %v352 = vunpack.c.l.b16 %v280
        %v353 = vunpack.c.l.b16 %v281
        %v354 = vunpack.c.l.b16 %v282
        %v355 = vunpack.c.l.b16 %v283
        %v356 = vunpack.c.l.b16 %v284
        %v357 = vunpack.c.l.b16 %v285
        %v358 = vunpack.c.l.b16 %v286
        %v359 = vunpack.c.l.b16 %v287
        %v360 = vpack.c.b16 %v329, %v328
        %v361 = vpack.c.b16 %v331, %v330
        %v362 = vpack.c.b16 %v333, %v332
        %v363 = vpack.c.b16 %v335, %v334
        %v364 = vpack.c.b16 %v337, %v336
        %v365 = vpack.c.b16 %v339, %v338
        %v366 = vpack.c.b16 %v341, %v340
        %v367 = vpack.c.b16 %v343, %v342
        %v368 = vpack.c.b16 %v345, %v344
        %v369 = vpack.c.b16 %v347, %v346
        %v370 = vpack.c.b16 %v349, %v348
        %v371 = vpack.c.b16 %v351, %v350
        %v372 = vpack.c.b16 %v353, %v352
        %v373 = vpack.c.b16 %v355, %v354
        %v374 = vpack.c.b16 %v357, %v356
        %v375 = vpack.c.b16 %v359, %v358
        %vm376 = vcmask 64512
        %v378 = vsel %vm376, %v360, 0
        %v381 = vsel %vm376, %v361, 0
        %v384 = vsel %vm376, %v362, 0
        %v387 = vsel %vm376, %v363, 0
        %v390 = vsel %vm376, %v364, 0
        %v393 = vsel %vm376, %v365, 0
        %v396 = vsel %vm376, %v366, 0
        %v399 = vsel %vm376, %v367, 0
        %v402 = vsel %vm376, %v368, 0
        %v405 = vsel %vm376, %v369, 0
        %v408 = vsel %vm376, %v370, 0
        %v411 = vsel %vm376, %v371, 0
        %v414 = vsel %vm376, %v372, 0
        %v417 = vsel %vm376, %v373, 0
        %v420 = vsel %vm376, %v374, 0
        %v423 = vsel %vm376, %v375, 0
        %vm425 = vcmask 1043456
        %v427 = vsel %vm425, %v288, 0
        %429 = vmatprep.subr.bf16.mxu0 0
        %430 = vmatpush1.bf16.msra.mxu0 %v427
        %431 = vmatprep.subr.bf16.mxu0 0
        %432 = vmatpush1.bf16.msra.mxu0 0
        %433 = vmatprep.subr.bf16.mxu0 0
        %434 = vmatpush1.bf16.msra.mxu0 0
        %435 = vmatprep.subr.bf16.mxu0 0
        %436 = vmatpush1.bf16.msra.mxu0 0
        %437 = vmatprep.subr.bf16.mxu0 0
        %438 = vmatpush1.bf16.msra.mxu0 0
        %439 = vmatprep.subr.bf16.mxu0 0
        %440 = vmatpush1.bf16.msra.mxu0 0
        %441 = vmatprep.subr.bf16.mxu0 0
        %442 = vmatpush1.bf16.msra.mxu0 0
        %443 = vmatprep.subr.bf16.mxu0 0
        %444 = vmatpush1.bf16.msra.mxu0 0
        %445 = vmatprep.subr.bf16.mxu0 0
        %446 = vmatpush1.bf16.msra.mxu0 0
        %447 = vmatprep.subr.bf16.mxu0 0
        %448 = vmatpush1.bf16.msra.mxu0 0
        %449 = vmatprep.subr.bf16.mxu0 0
        %450 = vmatpush1.bf16.msra.mxu0 0
        %451 = vmatprep.subr.bf16.mxu0 0
        %452 = vmatpush1.bf16.msra.mxu0 0
        %453 = vmatprep.subr.bf16.mxu0 0
        %454 = vmatpush1.bf16.msra.mxu0 0
        %455 = vmatprep.subr.bf16.mxu0 0
        %456 = vmatpush1.bf16.msra.mxu0 0
        %457 = vmatprep.subr.bf16.mxu0 0
        %458 = vmatpush1.bf16.msra.mxu0 0
        %459 = vmatprep.subr.bf16.mxu0 0
        %460 = vmatpush1.bf16.msra.mxu0 0
        %461 = vmatprep.mubr.bf16.mxu0 0
        %462 = vmatmul.mubr.bf16.gmra.mrb[0].mxu0 %v378
        %v463 = vpop.f32.mrb[0].mxu0
        %v464 = vadd.f32 %v294, %v463
        %v465 = vpop.f32.mrb[0].mxu0
        %v466 = vpop.f32.mrb[0].mxu0
        %v467 = vadd.f32 %v294, %v466
        %v468 = vpop.f32.mrb[0].mxu0
        %469 = vmatprep.mubr.bf16.mxu0 0
        %470 = vmatmul.mubr.bf16.gmra.mrb[0].mxu0 %v381
        %v471 = vpop.f32.mrb[0].mxu0
        %v472 = vadd.f32 %v294, %v471
        %v473 = vpop.f32.mrb[0].mxu0
        %v474 = vpop.f32.mrb[0].mxu0
        %v475 = vadd.f32 %v294, %v474
        %v476 = vpop.f32.mrb[0].mxu0
        %477 = vmatprep.mubr.bf16.mxu0 0
        %478 = vmatmul.mubr.bf16.gmra.mrb[0].mxu0 %v384
        %v479 = vpop.f32.mrb[0].mxu0
        %v480 = vadd.f32 %v294, %v479
        %v481 = vpop.f32.mrb[0].mxu0
        %v482 = vpop.f32.mrb[0].mxu0
        %v483 = vadd.f32 %v294, %v482
        %v484 = vpop.f32.mrb[0].mxu0
        %485 = vmatprep.mubr.bf16.mxu0 0
        %486 = vmatmul.mubr.bf16.gmra.mrb[0].mxu0 %v387
        %v487 = vpop.f32.mrb[0].mxu0
        %v488 = vadd.f32 %v294, %v487
        %v489 = vpop.f32.mrb[0].mxu0
        %v490 = vpop.f32.mrb[0].mxu0
        %v491 = vadd.f32 %v294, %v490
        %v492 = vpop.f32.mrb[0].mxu0
        %493 = vmatprep.mubr.bf16.mxu0 0
        %494 = vmatmul.mubr.bf16.gmra.mrb[0].mxu0 %v390
        %v495 = vpop.f32.mrb[0].mxu0
        %v496 = vadd.f32 %v294, %v495
        %v497 = vpop.f32.mrb[0].mxu0
        %v498 = vpop.f32.mrb[0].mxu0
        %v499 = vadd.f32 %v294, %v498
        %v500 = vpop.f32.mrb[0].mxu0
        %501 = vmatprep.mubr.bf16.mxu0 0
        %502 = vmatmul.mubr.bf16.gmra.mrb[0].mxu0 %v393
        %v503 = vpop.f32.mrb[0].mxu0
        %v504 = vadd.f32 %v294, %v503
        %v505 = vpop.f32.mrb[0].mxu0
        %v506 = vpop.f32.mrb[0].mxu0
        %v507 = vadd.f32 %v294, %v506
        %v508 = vpop.f32.mrb[0].mxu0
        %509 = vmatprep.mubr.bf16.mxu0 0
        %510 = vmatmul.mubr.bf16.gmra.mrb[0].mxu0 %v396
        %v511 = vpop.f32.mrb[0].mxu0
        %v512 = vadd.f32 %v294, %v511
        %v513 = vpop.f32.mrb[0].mxu0
        %v514 = vpop.f32.mrb[0].mxu0
        %v515 = vadd.f32 %v294, %v514
        %v516 = vpop.f32.mrb[0].mxu0
        %517 = vmatprep.mubr.bf16.mxu0 0
        %518 = vmatmul.mubr.bf16.gmra.mrb[0].mxu0 %v399
        %v519 = vpop.f32.mrb[0].mxu0
        %v520 = vadd.f32 %v294, %v519
        %v521 = vpop.f32.mrb[0].mxu0
        %v522 = vpop.f32.mrb[0].mxu0
        %v523 = vadd.f32 %v294, %v522
        %v524 = vpop.f32.mrb[0].mxu0
        %525 = vmatprep.mubr.bf16.mxu0 0
        %526 = vmatmul.mubr.bf16.gmra.mrb[0].mxu0 %v402
        %v527 = vpop.f32.mrb[0].mxu0
        %v528 = vadd.f32 %v294, %v527
        %v529 = vpop.f32.mrb[0].mxu0
        %v530 = vpop.f32.mrb[0].mxu0
        %v531 = vadd.f32 %v294, %v530
        %v532 = vpop.f32.mrb[0].mxu0
        %533 = vmatprep.mubr.bf16.mxu0 0
        %534 = vmatmul.mubr.bf16.gmra.mrb[0].mxu0 %v405
        %v535 = vpop.f32.mrb[0].mxu0
        %v536 = vadd.f32 %v294, %v535
        %v537 = vpop.f32.mrb[0].mxu0
        %v538 = vpop.f32.mrb[0].mxu0
        %v539 = vadd.f32 %v294, %v538
        %v540 = vpop.f32.mrb[0].mxu0
        %541 = vmatprep.mubr.bf16.mxu0 0
        %542 = vmatmul.mubr.bf16.gmra.mrb[0].mxu0 %v408
        %v543 = vpop.f32.mrb[0].mxu0
        %v544 = vadd.f32 %v294, %v543
        %v545 = vpop.f32.mrb[0].mxu0
        %v546 = vpop.f32.mrb[0].mxu0
        %v547 = vadd.f32 %v294, %v546
        %v548 = vpop.f32.mrb[0].mxu0
        %549 = vmatprep.mubr.bf16.mxu0 0
        %550 = vmatmul.mubr.bf16.gmra.mrb[0].mxu0 %v411
        %v551 = vpop.f32.mrb[0].mxu0
        %v552 = vadd.f32 %v294, %v551
        %v553 = vpop.f32.mrb[0].mxu0
        %v554 = vpop.f32.mrb[0].mxu0
        %v555 = vadd.f32 %v294, %v554
        %v556 = vpop.f32.mrb[0].mxu0
        %557 = vmatprep.mubr.bf16.mxu0 0
        %558 = vmatmul.mubr.bf16.gmra.mrb[0].mxu0 %v414
        %v559 = vpop.f32.mrb[0].mxu0
        %v560 = vadd.f32 %v294, %v559
        %v561 = vpop.f32.mrb[0].mxu0
        %v562 = vpop.f32.mrb[0].mxu0
        %v563 = vadd.f32 %v294, %v562
        %v564 = vpop.f32.mrb[0].mxu0
        %565 = vmatprep.mubr.bf16.mxu0 0
        %566 = vmatmul.mubr.bf16.gmra.mrb[0].mxu0 %v417
        %v567 = vpop.f32.mrb[0].mxu0
        %v568 = vadd.f32 %v294, %v567
        %v569 = vpop.f32.mrb[0].mxu0
        %v570 = vpop.f32.mrb[0].mxu0
        %v571 = vadd.f32 %v294, %v570
        %v572 = vpop.f32.mrb[0].mxu0
        %573 = vmatprep.mubr.bf16.mxu0 0
        %574 = vmatmul.mubr.bf16.gmra.mrb[0].mxu0 %v420
        %v575 = vpop.f32.mrb[0].mxu0
        %v576 = vadd.f32 %v294, %v575
        %v577 = vpop.f32.mrb[0].mxu0
        %v578 = vpop.f32.mrb[0].mxu0
        %v579 = vadd.f32 %v294, %v578
        %v580 = vpop.f32.mrb[0].mxu0
        %581 = vmatprep.mubr.bf16.mxu0 0
        %582 = vmatmul.mubr.bf16.gmra.mrb[0].mxu0 %v423
        %v583 = vpop.f32.mrb[0].mxu0
        %v584 = vadd.f32 %v294, %v583
        %v585 = vpop.f32.mrb[0].mxu0
        %v586 = vpop.f32.mrb[0].mxu0
        %v587 = vadd.f32 %v294, %v586
        %v588 = vpop.f32.mrb[0].mxu0
        %589 = vdwg.mxu0
        %v590 = vmax.f32 %v464, 0.0
        %v591 = vmax.f32 %v467, 0.0
        %v592 = vmax.f32 %v472, 0.0
        %v593 = vmax.f32 %v475, 0.0
        %v594 = vmax.f32 %v480, 0.0
        %v595 = vmax.f32 %v483, 0.0
        %v596 = vmax.f32 %v488, 0.0
        %v597 = vmax.f32 %v491, 0.0
        %v598 = vmax.f32 %v496, 0.0
        %v599 = vmax.f32 %v499, 0.0
        %v600 = vmax.f32 %v504, 0.0
        %v601 = vmax.f32 %v507, 0.0
        %v602 = vmax.f32 %v512, 0.0
        %v603 = vmax.f32 %v515, 0.0
        %v604 = vmax.f32 %v520, 0.0
        %v605 = vmax.f32 %v523, 0.0
        %v606 = vmax.f32 %v528, 0.0
        %v607 = vmax.f32 %v531, 0.0
        %v608 = vmax.f32 %v536, 0.0
        %v609 = vmax.f32 %v539, 0.0
        %v610 = vmax.f32 %v544, 0.0
        %v611 = vmax.f32 %v547, 0.0
        %v612 = vmax.f32 %v552, 0.0
        %v613 = vmax.f32 %v555, 0.0
        %v614 = vmax.f32 %v560, 0.0
        %v615 = vmax.f32 %v563, 0.0
        %v616 = vmax.f32 %v568, 0.0
        %v617 = vmax.f32 %v571, 0.0
        %v618 = vmax.f32 %v576, 0.0
        %v619 = vmax.f32 %v579, 0.0
        %v620 = vmax.f32 %v584, 0.0
        %v621 = vmax.f32 %v587, 0.0
        %v622 = vpack.c.bf16 %v591, %v590
        %v623 = vpack.c.bf16 %v593, %v592
        %v624 = vpack.c.bf16 %v595, %v594
        %v625 = vpack.c.bf16 %v597, %v596
        %v626 = vpack.c.bf16 %v599, %v598
        %v627 = vpack.c.bf16 %v601, %v600
        %v628 = vpack.c.bf16 %v603, %v602
        %v629 = vpack.c.bf16 %v605, %v604
        %v630 = vpack.c.bf16 %v607, %v606
        %v631 = vpack.c.bf16 %v609, %v608
        %v632 = vpack.c.bf16 %v611, %v610
        %v633 = vpack.c.bf16 %v613, %v612
        %v634 = vpack.c.bf16 %v615, %v614
        %v635 = vpack.c.bf16 %v617, %v616
        %v636 = vpack.c.bf16 %v619, %v618
        %v637 = vpack.c.bf16 %v621, %v620
        %v638 = vld [vmem:[%s3] sm:$0xf]
        %v639 = vld [vmem:[%s3 + $0x4] sm:$0xf]
        %v640 = vld [vmem:[%s3 + $0x8] sm:$0xf]
        %v641 = vld [vmem:[%s3 + $0xc] sm:$0xf]
        %v642 = vld [vmem:[%s3 + $0x10] sm:$0xf]
        %v643 = vld [vmem:[%s3 + $0x14] sm:$0xf]
        %v644 = vld [vmem:[%s3 + $0x18] sm:$0xf]
        %v645 = vld [vmem:[%s3 + $0x1c] sm:$0xf]
        %v646 = vld [vmem:[%s3 + $0x20] sm:$0xf]
        %v647 = vld [vmem:[%s3 + $0x24] sm:$0xf]
        %v648 = vld [vmem:[%s3 + $0x28] sm:$0xf]
        %v649 = vld [vmem:[%s3 + $0x2c] sm:$0xf]
        %v650 = vld [vmem:[%s3 + $0x30] sm:$0xf]
        %v651 = vld [vmem:[%s3 + $0x34] sm:$0xf]
        %v652 = vld [vmem:[%s3 + $0x38] sm:$0xf]
        %v653 = vld [vmem:[%s3 + $0x3c] sm:$0xf]
        %v654 = vld [vmem:[%s4] sm:$0x1]
        %v656 = vlaneseq
        %v657 = vshrl.u32 %v656, 7
        %v658 = vsub.s32 0, %v657
        %v659 = vrot.slane %v654, %v658
        %v677 = vunpack.c.l.b16 %v638
        %v678 = vunpack.c.l.b16 %v639
        %v679 = vunpack.c.l.b16 %v640
        %v680 = vunpack.c.l.b16 %v641
        %v681 = vunpack.c.l.b16 %v642
        %v682 = vunpack.c.l.b16 %v643
        %v683 = vunpack.c.l.b16 %v644
        %v684 = vunpack.c.l.b16 %v645
        %v685 = vunpack.c.l.b16 %v646
        %v686 = vunpack.c.l.b16 %v647
        %v687 = vunpack.c.l.b16 %v648
        %v688 = vunpack.c.l.b16 %v649
        %v689 = vunpack.c.l.b16 %v650
        %v690 = vunpack.c.l.b16 %v651
        %v691 = vunpack.c.l.b16 %v652
        %v692 = vunpack.c.l.b16 %v653
        %v693 = vpack.c.b16 %v678, %v677
        %v694 = vpack.c.b16 %v680, %v679
        %v695 = vpack.c.b16 %v682, %v681
        %v696 = vpack.c.b16 %v684, %v683
        %v697 = vpack.c.b16 %v686, %v685
        %v698 = vpack.c.b16 %v688, %v687
        %v699 = vpack.c.b16 %v690, %v689
        %v700 = vpack.c.b16 %v692, %v691
        %709 = vmatprep.subr.bf16.mxu0 0
        %710 = vmatpush1.bf16.msra.mxu0 %v693
        %711 = vmatprep.subr.bf16.mxu0 0
        %712 = vmatpush1.bf16.msra.mxu0 %v694
        %713 = vmatprep.subr.bf16.mxu0 0
        %714 = vmatpush1.bf16.msra.mxu0 %v695
        %715 = vmatprep.subr.bf16.mxu0 0
        %716 = vmatpush1.bf16.msra.mxu0 %v696
        %717 = vmatprep.subr.bf16.mxu0 0
        %718 = vmatpush1.bf16.msra.mxu0 %v697
        %719 = vmatprep.subr.bf16.mxu0 0
        %720 = vmatpush1.bf16.msra.mxu0 %v698
        %721 = vmatprep.subr.bf16.mxu0 0
        %722 = vmatpush1.bf16.msra.mxu0 %v699
        %723 = vmatprep.subr.bf16.mxu0 0
        %724 = vmatpush1.bf16.msra.mxu0 %v700
        %725 = vmatprep.subr.bf16.mxu0 0
        %726 = vmatpush1.bf16.msra.mxu0 0
        %727 = vmatprep.subr.bf16.mxu0 0
        %728 = vmatpush1.bf16.msra.mxu0 0
        %729 = vmatprep.subr.bf16.mxu0 0
        %730 = vmatpush1.bf16.msra.mxu0 0
        %731 = vmatprep.subr.bf16.mxu0 0
        %732 = vmatpush1.bf16.msra.mxu0 0
        %733 = vmatprep.subr.bf16.mxu0 0
        %734 = vmatpush1.bf16.msra.mxu0 0
        %735 = vmatprep.subr.bf16.mxu0 0
        %736 = vmatpush1.bf16.msra.mxu0 0
        %737 = vmatprep.subr.bf16.mxu0 0
        %738 = vmatpush1.bf16.msra.mxu0 0
        %739 = vmatprep.subr.bf16.mxu0 0
        %740 = vmatpush1.bf16.msra.mxu0 0
        %741 = vmatprep.mubr.bf16.mxu0 0
        %742 = vmatmul.mubr.bf16.gmra.mrb[0].mxu0 %v622
        %v743 = vpop.f32.mrb[0].mxu0
        %v744 = vadd.f32 %v659, %v743
        %v745 = vpop.f32.mrb[0].mxu0
        %v746 = vpop.f32.mrb[0].mxu0
        %v747 = vadd.f32 %v659, %v746
        %v748 = vpop.f32.mrb[0].mxu0
        %749 = vmatprep.mubr.bf16.mxu0 0
        %750 = vmatmul.mubr.bf16.gmra.mrb[0].mxu0 %v623
        %v751 = vpop.f32.mrb[0].mxu0
        %v752 = vadd.f32 %v659, %v751
        %v753 = vpop.f32.mrb[0].mxu0
        %v754 = vpop.f32.mrb[0].mxu0
        %v755 = vadd.f32 %v659, %v754
        %v756 = vpop.f32.mrb[0].mxu0
        %757 = vmatprep.mubr.bf16.mxu0 0
        %758 = vmatmul.mubr.bf16.gmra.mrb[0].mxu0 %v624
        %v759 = vpop.f32.mrb[0].mxu0
        %v760 = vadd.f32 %v659, %v759
        %v761 = vpop.f32.mrb[0].mxu0
        %v762 = vpop.f32.mrb[0].mxu0
        %v763 = vadd.f32 %v659, %v762
        %v764 = vpop.f32.mrb[0].mxu0
        %765 = vmatprep.mubr.bf16.mxu0 0
        %766 = vmatmul.mubr.bf16.gmra.mrb[0].mxu0 %v625
        %v767 = vpop.f32.mrb[0].mxu0
        %v768 = vadd.f32 %v659, %v767
        %v769 = vpop.f32.mrb[0].mxu0
        %v770 = vpop.f32.mrb[0].mxu0
        %v771 = vadd.f32 %v659, %v770
        %v772 = vpop.f32.mrb[0].mxu0
        %773 = vmatprep.mubr.bf16.mxu0 0
        %774 = vmatmul.mubr.bf16.gmra.mrb[0].mxu0 %v626
        %v775 = vpop.f32.mrb[0].mxu0
        %v776 = vadd.f32 %v659, %v775
        %v777 = vpop.f32.mrb[0].mxu0
        %v778 = vpop.f32.mrb[0].mxu0
        %v779 = vadd.f32 %v659, %v778
        %v780 = vpop.f32.mrb[0].mxu0
        %781 = vmatprep.mubr.bf16.mxu0 0
        %782 = vmatmul.mubr.bf16.gmra.mrb[0].mxu0 %v627
        %v783 = vpop.f32.mrb[0].mxu0
        %v784 = vadd.f32 %v659, %v783
        %v785 = vpop.f32.mrb[0].mxu0
        %v786 = vpop.f32.mrb[0].mxu0
        %v787 = vadd.f32 %v659, %v786
        %v788 = vpop.f32.mrb[0].mxu0
        %789 = vmatprep.mubr.bf16.mxu0 0
        %790 = vmatmul.mubr.bf16.gmra.mrb[0].mxu0 %v628
        %v791 = vpop.f32.mrb[0].mxu0
        %v792 = vadd.f32 %v659, %v791
        %v793 = vpop.f32.mrb[0].mxu0
        %v794 = vpop.f32.mrb[0].mxu0
        %v795 = vadd.f32 %v659, %v794
        %v796 = vpop.f32.mrb[0].mxu0
        %797 = vmatprep.mubr.bf16.mxu0 0
        %798 = vmatmul.mubr.bf16.gmra.mrb[0].mxu0 %v629
        %v799 = vpop.f32.mrb[0].mxu0
        %v800 = vadd.f32 %v659, %v799
        %v801 = vpop.f32.mrb[0].mxu0
        %v802 = vpop.f32.mrb[0].mxu0
        %v803 = vadd.f32 %v659, %v802
        %v804 = vpop.f32.mrb[0].mxu0
        %805 = vmatprep.mubr.bf16.mxu0 0
        %806 = vmatmul.mubr.bf16.gmra.mrb[0].mxu0 %v630
        %v807 = vpop.f32.mrb[0].mxu0
        %v808 = vadd.f32 %v659, %v807
        %v809 = vpop.f32.mrb[0].mxu0
        %v810 = vpop.f32.mrb[0].mxu0
        %v811 = vadd.f32 %v659, %v810
        %v812 = vpop.f32.mrb[0].mxu0
        %813 = vmatprep.mubr.bf16.mxu0 0
        %814 = vmatmul.mubr.bf16.gmra.mrb[0].mxu0 %v631
        %v815 = vpop.f32.mrb[0].mxu0
        %v816 = vadd.f32 %v659, %v815
        %v817 = vpop.f32.mrb[0].mxu0
        %v818 = vpop.f32.mrb[0].mxu0
        %v819 = vadd.f32 %v659, %v818
        %v820 = vpop.f32.mrb[0].mxu0
        %821 = vmatprep.mubr.bf16.mxu0 0
        %822 = vmatmul.mubr.bf16.gmra.mrb[0].mxu0 %v632
        %v823 = vpop.f32.mrb[0].mxu0
        %v824 = vadd.f32 %v659, %v823
        %v825 = vpop.f32.mrb[0].mxu0
        %v826 = vpop.f32.mrb[0].mxu0
        %v827 = vadd.f32 %v659, %v826
        %v828 = vpop.f32.mrb[0].mxu0
        %829 = vmatprep.mubr.bf16.mxu0 0
        %830 = vmatmul.mubr.bf16.gmra.mrb[0].mxu0 %v633
        %v831 = vpop.f32.mrb[0].mxu0
        %v832 = vadd.f32 %v659, %v831
        %v833 = vpop.f32.mrb[0].mxu0
        %v834 = vpop.f32.mrb[0].mxu0
        %v835 = vadd.f32 %v659, %v834
        %v836 = vpop.f32.mrb[0].mxu0
        %837 = vmatprep.mubr.bf16.mxu0 0
        %838 = vmatmul.mubr.bf16.gmra.mrb[0].mxu0 %v634
        %v839 = vpop.f32.mrb[0].mxu0
        %v840 = vadd.f32 %v659, %v839
        %v841 = vpop.f32.mrb[0].mxu0
        %v842 = vpop.f32.mrb[0].mxu0
        %v843 = vadd.f32 %v659, %v842
        %v844 = vpop.f32.mrb[0].mxu0
        %845 = vmatprep.mubr.bf16.mxu0 0
        %846 = vmatmul.mubr.bf16.gmra.mrb[0].mxu0 %v635
        %v847 = vpop.f32.mrb[0].mxu0
        %v848 = vadd.f32 %v659, %v847
        %v849 = vpop.f32.mrb[0].mxu0
        %v850 = vpop.f32.mrb[0].mxu0
        %v851 = vadd.f32 %v659, %v850
        %v852 = vpop.f32.mrb[0].mxu0
        %853 = vmatprep.mubr.bf16.mxu0 0
        %854 = vmatmul.mubr.bf16.gmra.mrb[0].mxu0 %v636
        %v855 = vpop.f32.mrb[0].mxu0
        %v856 = vadd.f32 %v659, %v855
        %v857 = vpop.f32.mrb[0].mxu0
        %v858 = vpop.f32.mrb[0].mxu0
        %v859 = vadd.f32 %v659, %v858
        %v860 = vpop.f32.mrb[0].mxu0
        %861 = vmatprep.mubr.bf16.mxu0 0
        %862 = vmatmul.mubr.bf16.gmra.mrb[0].mxu0 %v637
        %v863 = vpop.f32.mrb[0].mxu0
        %v864 = vadd.f32 %v659, %v863
        %v865 = vpop.f32.mrb[0].mxu0
        %v866 = vpop.f32.mrb[0].mxu0
        %v867 = vadd.f32 %v659, %v866
        %v868 = vpop.f32.mrb[0].mxu0
        %869 = vdwg.mxu0
        %v870 = vmax.f32 %v744, 0.0
        %v871 = vmax.f32 %v747, 0.0
        %v872 = vmax.f32 %v752, 0.0
        %v873 = vmax.f32 %v755, 0.0
        %v874 = vmax.f32 %v760, 0.0
        %v875 = vmax.f32 %v763, 0.0
        %v876 = vmax.f32 %v768, 0.0
        %v877 = vmax.f32 %v771, 0.0
        %v878 = vmax.f32 %v776, 0.0
        %v879 = vmax.f32 %v779, 0.0
        %v880 = vmax.f32 %v784, 0.0
        %v881 = vmax.f32 %v787, 0.0
        %v882 = vmax.f32 %v792, 0.0
        %v883 = vmax.f32 %v795, 0.0
        %v884 = vmax.f32 %v800, 0.0
        %v885 = vmax.f32 %v803, 0.0
        %v886 = vmax.f32 %v808, 0.0
        %v887 = vmax.f32 %v811, 0.0
        %v888 = vmax.f32 %v816, 0.0
        %v889 = vmax.f32 %v819, 0.0
        %v890 = vmax.f32 %v824, 0.0
        %v891 = vmax.f32 %v827, 0.0
        %v892 = vmax.f32 %v832, 0.0
        %v893 = vmax.f32 %v835, 0.0
        %v894 = vmax.f32 %v840, 0.0
        %v895 = vmax.f32 %v843, 0.0
        %v896 = vmax.f32 %v848, 0.0
        %v897 = vmax.f32 %v851, 0.0
        %v898 = vmax.f32 %v856, 0.0
        %v899 = vmax.f32 %v859, 0.0
        %v900 = vmax.f32 %v864, 0.0
        %v901 = vmax.f32 %v867, 0.0
        // Predicated region
        $region45: #{tpu_custom_call.1} parent=39 // pred_check
          %p902 = pneg %p251
        $region46: #{tpu_custom_call.1} parent=39 // pred_check_branch
          %904 = sbr.rel (%p902) target = $region48
        $region47: #{tpu_custom_call.1} parent=39 // pred_region
          %s905 = smul.u32 %s24, 256
          %v906 = vlaneseq
          %v907 = vshrl.u32 %v906, 7
          %v908 = vadd.s32 %v907, 8
          %v909 = vadd.s32 %v907, 16
          %v910 = vadd.s32 %v907, 24
          %v911 = vadd.s32 %v907, 32
          %v912 = vadd.s32 %v907, 40
          %v913 = vadd.s32 %v907, 48
          %v914 = vadd.s32 %v907, 56
          %v915 = vadd.s32 %v907, 64
          %v916 = vadd.s32 %v907, 72
          %v917 = vadd.s32 %v907, 80
          %v918 = vadd.s32 %v907, 88
          %v919 = vadd.s32 %v907, 96
          %v920 = vadd.s32 %v907, 104
          %v921 = vadd.s32 %v907, 112
          %v922 = vadd.s32 %v907, 120
          %v923 = vadd.s32 %v907, 128
          %v924 = vadd.s32 %v907, 136
          %v925 = vadd.s32 %v907, 144
          %v926 = vadd.s32 %v907, 152
          %v927 = vadd.s32 %v907, 160
          %v928 = vadd.s32 %v907, 168
          %v929 = vadd.s32 %v907, 176
          %v930 = vadd.s32 %v907, 184
          %v931 = vadd.s32 %v907, 192
          %v932 = vadd.s32 %v907, 200
          %v933 = vadd.s32 %v907, 208
          %v934 = vadd.s32 %v907, 216
          %v935 = vadd.s32 %v907, 224
          %v936 = vadd.s32 %v907, 232
          %v937 = vadd.s32 %v907, 240
          %v938 = vadd.s32 %v907, 248
          %v939 = vstv %s905
          %v940 = vadd.s32 %v939, %v907
          %v941 = vadd.s32 %v939, %v908
          %v942 = vadd.s32 %v939, %v909
          %v943 = vadd.s32 %v939, %v910
          %v944 = vadd.s32 %v939, %v911
          %v945 = vadd.s32 %v939, %v912
          %v946 = vadd.s32 %v939, %v913
          %v947 = vadd.s32 %v939, %v914
          %v948 = vadd.s32 %v939, %v915
          %v949 = vadd.s32 %v939, %v916
          %v950 = vadd.s32 %v939, %v917
          %v951 = vadd.s32 %v939, %v918
          %v952 = vadd.s32 %v939, %v919
          %v953 = vadd.s32 %v939, %v920
          %v954 = vadd.s32 %v939, %v921
          %v955 = vadd.s32 %v939, %v922
          %v956 = vadd.s32 %v939, %v923
          %v957 = vadd.s32 %v939, %v924
          %v958 = vadd.s32 %v939, %v925
          %v959 = vadd.s32 %v939, %v926
          %v960 = vadd.s32 %v939, %v927
          %v961 = vadd.s32 %v939, %v928
          %v962 = vadd.s32 %v939, %v929
          %v963 = vadd.s32 %v939, %v930
          %v964 = vadd.s32 %v939, %v931
          %v965 = vadd.s32 %v939, %v932
          %v966 = vadd.s32 %v939, %v933
          %v967 = vadd.s32 %v939, %v934
          %v968 = vadd.s32 %v939, %v935
          %v969 = vadd.s32 %v939, %v936
          %v970 = vadd.s32 %v939, %v937
          %v971 = vadd.s32 %v939, %v938
          %vm972 = vcmp.lt.s32.totalorder %v940, 100
          %vm973 = vcmp.lt.s32.totalorder %v941, 100
          %vm974 = vcmp.lt.s32.totalorder %v942, 100
          %vm975 = vcmp.lt.s32.totalorder %v943, 100
          %vm976 = vcmp.lt.s32.totalorder %v944, 100
          %vm977 = vcmp.lt.s32.totalorder %v945, 100
          %vm978 = vcmp.lt.s32.totalorder %v946, 100
          %vm979 = vcmp.lt.s32.totalorder %v947, 100
          %vm980 = vcmp.lt.s32.totalorder %v948, 100
          %vm981 = vcmp.lt.s32.totalorder %v949, 100
          %vm982 = vcmp.lt.s32.totalorder %v950, 100
          %vm983 = vcmp.lt.s32.totalorder %v951, 100
          %vm984 = vcmp.lt.s32.totalorder %v952, 100
          %vm985 = vcmp.lt.s32.totalorder %v953, 100
          %vm986 = vcmp.lt.s32.totalorder %v954, 100
          %vm987 = vcmp.lt.s32.totalorder %v955, 100
          %vm988 = vcmp.lt.s32.totalorder %v956, 100
          %vm989 = vcmp.lt.s32.totalorder %v957, 100
          %vm990 = vcmp.lt.s32.totalorder %v958, 100
          %vm991 = vcmp.lt.s32.totalorder %v959, 100
          %vm992 = vcmp.lt.s32.totalorder %v960, 100
          %vm993 = vcmp.lt.s32.totalorder %v961, 100
          %vm994 = vcmp.lt.s32.totalorder %v962, 100
          %vm995 = vcmp.lt.s32.totalorder %v963, 100
          %vm996 = vcmp.lt.s32.totalorder %v964, 100
          %vm997 = vcmp.lt.s32.totalorder %v965, 100
          %vm998 = vcmp.lt.s32.totalorder %v966, 100
          %vm999 = vcmp.lt.s32.totalorder %v967, 100
          %vm1000 = vcmp.lt.s32.totalorder %v968, 100
          %vm1001 = vcmp.lt.s32.totalorder %v969, 100
          %vm1002 = vcmp.lt.s32.totalorder %v970, 100
          %vm1003 = vcmp.lt.s32.totalorder %v971, 100
          %v1004 = vsel %vm972, 1, 0
          %v1005 = vsel %vm973, 1, 0
          %v1006 = vsel %vm974, 1, 0
          %v1007 = vsel %vm975, 1, 0
          %v1008 = vsel %vm976, 1, 0
          %v1009 = vsel %vm977, 1, 0
          %v1010 = vsel %vm978, 1, 0
          %v1011 = vsel %vm979, 1, 0
          %v1012 = vsel %vm980, 1, 0
          %v1013 = vsel %vm981, 1, 0
          %v1014 = vsel %vm982, 1, 0
          %v1015 = vsel %vm983, 1, 0
          %v1016 = vsel %vm984, 1, 0
          %v1017 = vsel %vm985, 1, 0
          %v1018 = vsel %vm986, 1, 0
          %v1019 = vsel %vm987, 1, 0
          %v1020 = vsel %vm988, 1, 0
          %v1021 = vsel %vm989, 1, 0
          %v1022 = vsel %vm990, 1, 0
          %v1023 = vsel %vm991, 1, 0
          %v1024 = vsel %vm992, 1, 0
          %v1025 = vsel %vm993, 1, 0
          %v1026 = vsel %vm994, 1, 0
          %v1027 = vsel %vm995, 1, 0
          %v1028 = vsel %vm996, 1, 0
          %v1029 = vsel %vm997, 1, 0
          %v1030 = vsel %vm998, 1, 0
          %v1031 = vsel %vm999, 1, 0
          %v1032 = vsel %vm1000, 1, 0
          %v1033 = vsel %vm1001, 1, 0
          %v1034 = vsel %vm1002, 1, 0
          %v1035 = vsel %vm1003, 1, 0
          %vm1036 = vcmp.eq.s32.totalorder %v1004, 1
          %vm1037 = vcmp.eq.s32.totalorder %v1005, 1
          %vm1038 = vcmp.eq.s32.totalorder %v1006, 1
          %vm1039 = vcmp.eq.s32.totalorder %v1007, 1
          %vm1040 = vcmp.eq.s32.totalorder %v1008, 1
          %vm1041 = vcmp.eq.s32.totalorder %v1009, 1
          %vm1042 = vcmp.eq.s32.totalorder %v1010, 1
          %vm1043 = vcmp.eq.s32.totalorder %v1011, 1
          %vm1044 = vcmp.eq.s32.totalorder %v1012, 1
          %vm1045 = vcmp.eq.s32.totalorder %v1013, 1
          %vm1046 = vcmp.eq.s32.totalorder %v1014, 1
          %vm1047 = vcmp.eq.s32.totalorder %v1015, 1
          %vm1048 = vcmp.eq.s32.totalorder %v1016, 1
          %vm1049 = vcmp.eq.s32.totalorder %v1017, 1
          %vm1050 = vcmp.eq.s32.totalorder %v1018, 1
          %vm1051 = vcmp.eq.s32.totalorder %v1019, 1
          %vm1052 = vcmp.eq.s32.totalorder %v1020, 1
          %vm1053 = vcmp.eq.s32.totalorder %v1021, 1
          %vm1054 = vcmp.eq.s32.totalorder %v1022, 1
          %vm1055 = vcmp.eq.s32.totalorder %v1023, 1
          %vm1056 = vcmp.eq.s32.totalorder %v1024, 1
          %vm1057 = vcmp.eq.s32.totalorder %v1025, 1
          %vm1058 = vcmp.eq.s32.totalorder %v1026, 1
          %vm1059 = vcmp.eq.s32.totalorder %v1027, 1
          %vm1060 = vcmp.eq.s32.totalorder %v1028, 1
          %vm1061 = vcmp.eq.s32.totalorder %v1029, 1
          %vm1062 = vcmp.eq.s32.totalorder %v1030, 1
          %vm1063 = vcmp.eq.s32.totalorder %v1031, 1
          %vm1064 = vcmp.eq.s32.totalorder %v1032, 1
          %vm1065 = vcmp.eq.s32.totalorder %v1033, 1
          %vm1066 = vcmp.eq.s32.totalorder %v1034, 1
          %vm1067 = vcmp.eq.s32.totalorder %v1035, 1
          %v1068 = vsel %vm1036, %v870, 0.0
          %v1069 = vsel %vm1037, %v871, 0.0
          %v1070 = vsel %vm1038, %v872, 0.0
          %v1071 = vsel %vm1039, %v873, 0.0
          %v1072 = vsel %vm1040, %v874, 0.0
          %v1073 = vsel %vm1041, %v875, 0.0
          %v1074 = vsel %vm1042, %v876, 0.0
          %v1075 = vsel %vm1043, %v877, 0.0
          %v1076 = vsel %vm1044, %v878, 0.0
          %v1077 = vsel %vm1045, %v879, 0.0
          %v1078 = vsel %vm1046, %v880, 0.0
          %v1079 = vsel %vm1047, %v881, 0.0
          %v1080 = vsel %vm1048, %v882, 0.0
          %v1081 = vsel %vm1049, %v883, 0.0
          %v1082 = vsel %vm1050, %v884, 0.0
          %v1083 = vsel %vm1051, %v885, 0.0
          %v1084 = vsel %vm1052, %v886, 0.0
          %v1085 = vsel %vm1053, %v887, 0.0
          %v1086 = vsel %vm1054, %v888, 0.0
          %v1087 = vsel %vm1055, %v889, 0.0
          %v1088 = vsel %vm1056, %v890, 0.0
          %v1089 = vsel %vm1057, %v891, 0.0
          %v1090 = vsel %vm1058, %v892, 0.0
          %v1091 = vsel %vm1059, %v893, 0.0
          %v1092 = vsel %vm1060, %v894, 0.0
          %v1093 = vsel %vm1061, %v895, 0.0
          %v1094 = vsel %vm1062, %v896, 0.0
          %v1095 = vsel %vm1063, %v897, 0.0
          %v1096 = vsel %vm1064, %v898, 0.0
          %v1097 = vsel %vm1065, %v899, 0.0
          %v1098 = vsel %vm1066, %v900, 0.0
          %v1099 = vsel %vm1067, %v901, 0.0
          %v1100 = vmax.f32 %v1068, %v1072
          %v1101 = vmax.f32 %v1069, %v1073
          %v1102 = vmax.f32 %v1070, %v1074
          %v1103 = vmax.f32 %v1071, %v1075
          %v1104 = vmax.f32 %v1100, %v1076
          %v1105 = vmax.f32 %v1101, %v1077
          %v1106 = vmax.f32 %v1102, %v1078
          %v1107 = vmax.f32 %v1103, %v1079
          %v1108 = vmax.f32 %v1104, %v1080
          %v1109 = vmax.f32 %v1105, %v1081
          %v1110 = vmax.f32 %v1106, %v1082
          %v1111 = vmax.f32 %v1107, %v1083
          %v1112 = vmax.f32 %v1108, %v1084
          %v1113 = vmax.f32 %v1109, %v1085
          %v1114 = vmax.f32 %v1110, %v1086
          %v1115 = vmax.f32 %v1111, %v1087
          %v1116 = vmax.f32 %v1112, %v1088
          %v1117 = vmax.f32 %v1113, %v1089
          %v1118 = vmax.f32 %v1114, %v1090
          %v1119 = vmax.f32 %v1115, %v1091
          %v1120 = vmax.f32 %v1116, %v1092
          %v1121 = vmax.f32 %v1117, %v1093
          %v1122 = vmax.f32 %v1118, %v1094
          %v1123 = vmax.f32 %v1119, %v1095
          %v1124 = vmax.f32 %v1120, %v1096
          %v1125 = vmax.f32 %v1121, %v1097
          %v1126 = vmax.f32 %v1122, %v1098
          %v1127 = vmax.f32 %v1123, %v1099
          %v1128 = vmax.f32 %v1124, %v1125
          %v1129 = vmax.f32 %v1126, %v1127
          %v1130 = vmax.f32 %v1128, %v1129
          %v1131 = vld [vmem:[#allocation2] sm:$0xff]
          %v1132 = vmax.f32 %v1131, %v1130
          %1133 = vst [vmem:[#allocation2] sm:$0xff] %v1132
        $region48: #{tpu_custom_call.1} parent=39 // pred_fallthru
          _
        %p1134 = scmp.ne.s32.totalorder %s24, 0
        // Predicated region
        $region49: #{tpu_custom_call.1} parent=39 // pred_check
          %p1135 = pneg %p1134
        $region50: #{tpu_custom_call.1} parent=39 // pred_check_branch
          %1137 = sbr.rel (%p1135) target = $region52
        $region51: #{tpu_custom_call.1} parent=39 // pred_region
          %v1138 = vmax.f32 %v870, %v874
          %v1139 = vmax.f32 %v871, %v875
          %v1140 = vmax.f32 %v872, %v876
          %v1141 = vmax.f32 %v873, %v877
          %v1142 = vmax.f32 %v1138, %v878
          %v1143 = vmax.f32 %v1139, %v879
          %v1144 = vmax.f32 %v1140, %v880
          %v1145 = vmax.f32 %v1141, %v881
          %v1146 = vmax.f32 %v1142, %v882
          %v1147 = vmax.f32 %v1143, %v883
          %v1148 = vmax.f32 %v1144, %v884
          %v1149 = vmax.f32 %v1145, %v885
          %v1150 = vmax.f32 %v1146, %v886
          %v1151 = vmax.f32 %v1147, %v887
          %v1152 = vmax.f32 %v1148, %v888
          %v1153 = vmax.f32 %v1149, %v889
          %v1154 = vmax.f32 %v1150, %v890
          %v1155 = vmax.f32 %v1151, %v891
          %v1156 = vmax.f32 %v1152, %v892
          %v1157 = vmax.f32 %v1153, %v893
          %v1158 = vmax.f32 %v1154, %v894
          %v1159 = vmax.f32 %v1155, %v895
          %v1160 = vmax.f32 %v1156, %v896
          %v1161 = vmax.f32 %v1157, %v897
          %v1162 = vmax.f32 %v1158, %v898
          %v1163 = vmax.f32 %v1159, %v899
          %v1164 = vmax.f32 %v1160, %v900
          %v1165 = vmax.f32 %v1161, %v901
          %v1166 = vmax.f32 %v1162, %v1163
          %v1167 = vmax.f32 %v1164, %v1165
          %v1168 = vmax.f32 %v1166, %v1167
          %v1169 = vld [vmem:[#allocation2] sm:$0xff]
          %v1170 = vmax.f32 %v1169, %v1168
          %1171 = vst [vmem:[#allocation2] sm:$0xff] %v1170
        $region52: #{tpu_custom_call.1} parent=39 // pred_fallthru
          _
        // Predicated region
        $region53: #{tpu_custom_call.1} parent=39 // pred_check
          %p1172 = pneg %p251
        $region54: #{tpu_custom_call.1} parent=39 // pred_check_branch
          %1174 = sbr.rel (%p1172) target = $region56
        $region55: #{tpu_custom_call.1} parent=39 // pred_region
          %v1175 = vld [vmem:[#allocation2] sm:$0xff]
          %v1176 = vrot.slane %v1175, 4
          %v1177 = vmax.f32 %v1175, %v1176
          %v1178 = vrot.slane %v1177, 2
          %v1179 = vmax.f32 %v1177, %v1178
          %v1180 = vrot.slane %v1179, 1
          %v1181 = vmax.f32 %v1179, %v1180
          %1182 = vst [vmem:[%s239] sm:$0x1] %v1181
        $region56: #{tpu_custom_call.1} parent=39 // pred_fallthru
          _
        %s1183 = sand.u32 %s151, 1
        %s1184 = scalar_lea.sflag [#allocation4], %s1183
        %s1185 = sand.u32 %s151, 1
        %s1186 = scalar_lea.vmem [#allocation3], %s1185
        // Predicated region
        $region57: #{tpu_custom_call.1} parent=39 // pred_check
          %p1187 = pneg %p161
        $region58: #{tpu_custom_call.1} parent=39 // pred_check_branch
          %1189 = sbr.rel (%p1187) target = $region60
        $region59: #{tpu_custom_call.1} parent=39 // pred_region
          %s1191 = ssub.s32 16, 16
          %1192 = vsyncadd %s1184, %s1191
          %s1193 = smul.addr %s23, 16
          %s1194 = scalar_lea.hbm %s5, %s1193
          %s1196 = sshll.u32 %s1186, 4
          %s1197 = int_to_ptr.vmem [resolvable:$true] %s1196
          %1199 = dma.vmem_to_hbm [thread:$0]  %s1197, 16, %s1194, %s1184
        $region60: #{tpu_custom_call.1} parent=39 // pred_fallthru
          _
      $region40: #{tpu_custom_call.1} parent=5 // pred_fallthru
        _
      %p1200 = scmp.le.s32.totalorder 2, %s14
      // Predicated region
      $region61: #{tpu_custom_call.1} parent=5 // pred_check
        %p1201 = pneg %p1200
      $region62: #{tpu_custom_call.1} parent=5 // pred_check_branch
        %1203 = sbr.rel (%p1201) target = $region64
      $region63: #{tpu_custom_call.1} parent=5 // pred_region
        %s1204 = ssub.s32 %s14, 2
        // Predicated region
        $region65: #{tpu_custom_call.1} parent=63 // pred_check
          %p1205 = pneg %p167
        $region66: #{tpu_custom_call.1} parent=63 // pred_check_branch
          %1207 = sbr.rel (%p1205) target = $region68
        $region67: #{tpu_custom_call.1} parent=63 // pred_region
          %s1208 = sand.u32 %s152, 1
          %s1209 = scalar_lea.sflag [#allocation4], %s1208
          %s1210 = sand.u32 %s152, 1
          %s1211 = scalar_lea.vmem [#allocation3], %s1210
          %1212 = dma.done %s1209, 16
        $region68: #{tpu_custom_call.1} parent=63 // pred_fallthru
          _
      $region64: #{tpu_custom_call.1} parent=5 // pred_fallthru
        _
    $region6: #{tpu_custom_call.1} parent=1 // loop_footer
      %s18 = sadd.s32 1, %s14
    $region7: #{tpu_custom_call.1} parent=1 // loop_footer_branch
      %13 = sbr.rel target = $region3
    $region8: #{tpu_custom_call.1} parent=1 // loop_exit
      _
    %1213 = vsyncpa [#allocation4], 1
    %s1214 = scalar_lea.sflag [#allocation4], 1
    %1215 = vsyncpa %s1214, 1

</llo_original>
